<compile_context>
chip_gen: v6e
topology: v6e:2x2x1
jax: 0.10.0
libtpu: 0.0.40
codegen_flags: <defaults>
</compile_context>

<pallas_src>
import functools

import jax
import jax.numpy as jnp
from jax.experimental import pallas as pl
from jax.experimental.pallas import tpu as pltpu


def _round_up(x, m):
    return ((x + m - 1) // m) * m


def _cdiv(a, b):
    return -(-a // b)


# ----------------------------------------------------------------------------
# Fused MLP kernel: chain of (h @ W + b) -> LeakyReLU, final layer plain affine.
# refs = (x_ref, w0, b0, w1, b1, ..., o_ref); weights already BN-folded.
# ----------------------------------------------------------------------------
def _fused_mlp_kernel(*refs, num_layers):
    x_ref = refs[0]
    o_ref = refs[-1]
    params = refs[1:-1]  # alternating (w, b) refs, all VMEM-resident

    h = x_ref[...].astype(jnp.float32)  # widen-on-load (bf16 streaming safe on v5e)
    for li in range(num_layers):        # static unroll (per-layer shapes differ)
        w = params[2 * li][...]
        b = params[2 * li + 1][...]
        z = jnp.dot(h, w, preferred_element_type=jnp.float32) + b
        if li < num_layers - 1:
            h = jnp.where(z >= 0.0, z, 0.01 * z)  # F.leaky_relu default slope
        else:
            h = z
    o_ref[...] = h.astype(o_ref.dtype)


def _choose_tile(n, *, max_tile=8192, min_split=512, granule=16):
    """Pick a batch tile.

    Rules (from the perf review):
      * multiple of `granule` (16 works for both f32 and bf16 sublane packing),
      * big tiles (up to max_tile) to amortize per-grid-step overhead,
      * padding waste bounded to ~granule rows per step (never a whole wasted
        tile of garbage rows),
      * at least 2 grid steps for large N so v7x's two TensorCores share work.
    Returns (tile_n, n_pad).
    """
    n_g = _round_up(max(n, granule), granule)
    if n_g <= min_split:
        return n_g, n_g  # tiny batch: one step, no splitting overhead
    steps = max(2, _cdiv(n_g, max_tile))
    tile = _round_up(_cdiv(n_g, steps), granule)
    n_pad = _round_up(n_g, tile)
    return tile, n_pad


def fused_mlp(x, weights, biases, *, max_tile_n=8192):
    """x: [N, F_in]; weights[i]: [F_in_i, F_out_i] (BN-folded); biases[i]: [F_out_i].

    Returns [N, weights[-1].shape[1]] in float32.
    """
    n, f_in = x.shape
    num_layers = len(weights)
    out_dim = weights[-1].shape[1]

    tile_n, n_pad = _choose_tile(n, max_tile=max_tile_n)
    if n_pad != n:
        x = jnp.pad(x, ((0, n_pad - n), (0, 0)))
    grid = (n_pad // tile_n,)

    in_specs = [pl.BlockSpec((tile_n, f_in), lambda i: (i, 0))]
    flat_params = []
    for w, b in zip(weights, biases):
        b2 = b.reshape(1, -1)
        # Full-extent blocks with a constant index_map -> params stay resident
        # in VMEM across all grid steps (no re-fetch).
        in_specs.append(pl.BlockSpec(w.shape, lambda i: (0, 0)))
        in_specs.append(pl.BlockSpec(b2.shape, lambda i: (0, 0)))
        flat_params.extend([w, b2])

    # Advisory cost hint for the XLA scheduler.
    flops = 2 * n_pad * sum(int(w.shape[0]) * int(w.shape[1]) for w in weights)
    param_bytes = sum(int(p.size) * p.dtype.itemsize for p in flat_params)
    bytes_accessed = (n_pad * f_in * x.dtype.itemsize      # x read
                      + n_pad * out_dim * 4                # output write (f32)
                      + param_bytes)                       # resident params

    kernel = functools.partial(_fused_mlp_kernel, num_layers=num_layers)
    out = pl.pallas_call(
        kernel,
        out_shape=jax.ShapeDtypeStruct((n_pad, out_dim), jnp.float32),
        grid=grid,
        in_specs=in_specs,
        # Block last dim == full array last dim -> legal, dense HBM writeback,
        # no 128-lane zero padding.
        out_specs=pl.BlockSpec((tile_n, out_dim), lambda i: (i, 0)),
        compiler_params=pltpu.CompilerParams(
            dimension_semantics=("parallel",),     # batch axis shards across TCs
            vmem_limit_bytes=32 * 1024 * 1024,     # safe on v5e/v6e/v7x
        ),
        cost_estimate=pl.CostEstimate(
            flops=flops, transcendentals=0, bytes_accessed=bytes_accessed),
    )(x, *flat_params)
    return out[:n]


# ----------------------------------------------------------------------------
# Module wrapper (parameter setup / BN folding is plain JAX glue).
# ----------------------------------------------------------------------------
class ClassificationLayerPallas:
    def __init__(self, linear_param, key, *, stream_bf16=False):
        out_lin = linear_param["out_lin"]
        num_layers = linear_param["num_layers"]
        classification = linear_param["classification"]
        self.dropout = linear_param["dropout"]  # identity in eval mode
        self.classification = classification
        self.stream_bf16 = stream_bf16          # bandwidth opt for v6e/v7x

        # Layer widths, exactly as the PyTorch __init__ builds them.
        dims = [out_lin]
        for i in range(num_layers - 1):
            dims.append(out_lin // (2 ** (i + 1)))
        dims.append(classification)
        self.dims = dims  # e.g. [32, 16, 8, 4]

        eps = 1e-5
        # Raw (unfolded) params, kept only for the pure-JAX reference.
        self._w_t, self._b, self._bn_s, self._bn_t = [], [], [], []
        # Kernel-ready params: BN folded into W/b.
        self.weights = []
        self.biases = []

        for li in range(len(dims) - 1):
            f_in, f_out = dims[li], dims[li + 1]
            key, kw, kb = jax.random.split(key, 3)
            bound = 1.0 / (f_in ** 0.5)
            w = jax.random.uniform(kw, (f_out, f_in), jnp.float32, -bound, bound)
            b = jax.random.uniform(kb, (f_out,), jnp.float32, -bound, bound)
            w_t = w.T  # [F_in, F_out]
            self._w_t.append(w_t)
            self._b.append(b)

            if li < len(dims) - 2:
                # Fresh BatchNorm1d defaults: gamma=1, beta=0, mean=0, var=1.
                gamma = jnp.ones((f_out,), jnp.float32)
                beta = jnp.zeros((f_out,), jnp.float32)
                run_mean = jnp.zeros((f_out,), jnp.float32)
                run_var = jnp.ones((f_out,), jnp.float32)
                s = gamma / jnp.sqrt(run_var + eps)
                t = beta - run_mean * s
                self._bn_s.append(s)
                self._bn_t.append(t)
                # Fold: (x @ Wt + b) * s + t == x @ (Wt * s) + (b * s + t)
                self.weights.append(w_t * s[None, :])
                self.biases.append(b * s + t)
            else:
                # Final classification layer: no BN/activation, no lane padding.
                self.weights.append(w_t)
                self.biases.append(b)

    def __call__(self, x):
        if self.stream_bf16:
            x = x.astype(jnp.bfloat16)   # halve x-read DMA; accumulate in f32
        return fused_mlp(x, self.weights, self.biases)

    def reference(self, x):
        """Pure-JAX eval-mode reference (unfolded params) for correctness."""
        n_layers = len(self._w_t)
        for i in range(n_layers - 1):
            z = x @ self._w_t[i] + self._b[i]
            z = z * self._bn_s[i] + self._bn_t[i]
            x = jnp.where(z >= 0.0, z, 0.01 * z)
        return x @ self._w_t[-1] + self._b[-1]


if __name__ == "__main__":
    linear_param = {
        "out_lin": 32,
        "num_layers": 3,
        "classification": 4,
        "dropout": 0.5,
    }
    key = jax.random.PRNGKey(0)
    key, kparams, kx, kx2 = jax.random.split(key, 4)

    model = ClassificationLayerPallas(linear_param, kparams)

    # Small batch (single grid step).
    x = jax.random.normal(kx, (8, linear_param["out_lin"]), jnp.float32)
    out = jax.block_until_ready(model(x))
    ref = model.reference(x)
    assert out.shape == (8, linear_param["classification"])
    assert jnp.allclose(out, ref, atol=1e-5, rtol=1e-5), "mismatch vs reference (small)"

    # Larger batch: exercises multi-step grid, adaptive tiling and row padding.
    x2 = jax.random.normal(kx2, (1000, linear_param["out_lin"]), jnp.float32)
    out2 = jax.block_until_ready(model(x2))
    ref2 = model.reference(x2)
    assert out2.shape == (1000, linear_param["classification"])
    assert jnp.allclose(out2, ref2, atol=1e-5, rtol=1e-5), "mismatch vs reference (tiled)"

    # bf16-streaming variant (bandwidth optimization for v6e/v7x); f32 accumulation.
    model_bf16 = ClassificationLayerPallas(linear_param, kparams, stream_bf16=True)
    out_bf = jax.block_until_ready(model_bf16(x2))
    assert out_bf.shape == (1000, linear_param["classification"])
    assert jnp.allclose(out_bf, ref2, atol=3e-2, rtol=3e-2), "mismatch vs reference (bf16)"

    print("KERNEL_OK")
</pallas_src>

<mosaic_0001>
module attributes {stable_mosaic.version = 11 : i64} {
  func.func @_fused_mlp_kernel(%arg0: i32, %arg1: memref<16x32xf32, #tpu.memory_space<vmem>>, %arg2: memref<32x16xf32, #tpu.memory_space<vmem>>, %arg3: memref<1x16xf32, #tpu.memory_space<vmem>>, %arg4: memref<16x8xf32, #tpu.memory_space<vmem>>, %arg5: memref<1x8xf32, #tpu.memory_space<vmem>>, %arg6: memref<8x4xf32, #tpu.memory_space<vmem>>, %arg7: memref<1x4xf32, #tpu.memory_space<vmem>>, %arg8: memref<16x4xf32, #tpu.memory_space<vmem>>) attributes {dimension_semantics = [#tpu.dimension_semantics<parallel>], iteration_bounds = array<i64: 1>, scalar_prefetch = 0 : i64, scratch_operands = 0 : i64, tpu.core_type = #tpu.core_type<tc>, window_params = [{transform_indices = @transform_0, window_bounds = array<i64: 16, 32>}, {pipeline_mode = #tpu.pipeline_mode<synchronous>, transform_indices = @transform_1, window_bounds = array<i64: 32, 16>}, {pipeline_mode = #tpu.pipeline_mode<synchronous>, transform_indices = @transform_2, window_bounds = array<i64: 1, 16>}, {pipeline_mode = #tpu.pipeline_mode<synchronous>, transform_indices = @transform_3, window_bounds = array<i64: 16, 8>}, {pipeline_mode = #tpu.pipeline_mode<synchronous>, transform_indices = @transform_4, window_bounds = array<i64: 1, 8>}, {pipeline_mode = #tpu.pipeline_mode<synchronous>, transform_indices = @transform_5, window_bounds = array<i64: 8, 4>}, {pipeline_mode = #tpu.pipeline_mode<synchronous>, transform_indices = @transform_6, window_bounds = array<i64: 1, 4>}, {transform_indices = @transform_7, window_bounds = array<i64: 16, 4>}]} {
    %c0 = arith.constant 0 : index
    %c0_0 = arith.constant 0 : index
    %0 = vector.load %arg1[%c0, %c0_0] : memref<16x32xf32, #tpu.memory_space<vmem>>, vector<16x32xf32>
    %c0_1 = arith.constant 0 : index
    %c0_2 = arith.constant 0 : index
    %1 = vector.load %arg2[%c0_1, %c0_2] : memref<32x16xf32, #tpu.memory_space<vmem>>, vector<32x16xf32>
    %c0_3 = arith.constant 0 : index
    %c0_4 = arith.constant 0 : index
    %2 = vector.load %arg3[%c0_3, %c0_4] : memref<1x16xf32, #tpu.memory_space<vmem>>, vector<1x16xf32>
    %cst = arith.constant dense<0.000000e+00> : vector<16x16xf32>
    %3 = tpu.matmul %0, %1, %cst {dimension_numbers = #tpu.dot_dimension_numbers<[1], [0], [0], [1], [0, 0, 1, 1], [], []>} : vector<16x32xf32>, vector<32x16xf32>, vector<16x16xf32> -> vector<16x16xf32>
    %4 = vector.broadcast %2 : vector<1x16xf32> to vector<16x16xf32>
    %5 = arith.addf %3, %4 : vector<16x16xf32>
    %cst_5 = arith.constant 0.000000e+00 : f32
    %6 = vector.broadcast %cst_5 : f32 to vector<16x16xf32>
    %7 = arith.cmpf oge, %5, %6 : vector<16x16xf32>
    %cst_6 = arith.constant 0.00999999977 : f32
    %8 = vector.broadcast %cst_6 : f32 to vector<16x16xf32>
    %9 = arith.mulf %8, %5 : vector<16x16xf32>
    %10 = arith.select %7, %5, %9 : vector<16x16xi1>, vector<16x16xf32>
    %c0_7 = arith.constant 0 : index
    %c0_8 = arith.constant 0 : index
    %11 = vector.load %arg4[%c0_7, %c0_8] : memref<16x8xf32, #tpu.memory_space<vmem>>, vector<16x8xf32>
    %c0_9 = arith.constant 0 : index
    %c0_10 = arith.constant 0 : index
    %12 = vector.load %arg5[%c0_9, %c0_10] : memref<1x8xf32, #tpu.memory_space<vmem>>, vector<1x8xf32>
    %cst_11 = arith.constant dense<0.000000e+00> : vector<16x8xf32>
    %13 = tpu.matmul %10, %11, %cst_11 {dimension_numbers = #tpu.dot_dimension_numbers<[1], [0], [0], [1], [0, 0, 1, 1], [], []>} : vector<16x16xf32>, vector<16x8xf32>, vector<16x8xf32> -> vector<16x8xf32>
    %14 = vector.broadcast %12 : vector<1x8xf32> to vector<16x8xf32>
    %15 = arith.addf %13, %14 : vector<16x8xf32>
    %cst_12 = arith.constant 0.000000e+00 : f32
    %16 = vector.broadcast %cst_12 : f32 to vector<16x8xf32>
    %17 = arith.cmpf oge, %15, %16 : vector<16x8xf32>
    %cst_13 = arith.constant 0.00999999977 : f32
    %18 = vector.broadcast %cst_13 : f32 to vector<16x8xf32>
    %19 = arith.mulf %18, %15 : vector<16x8xf32>
    %20 = arith.select %17, %15, %19 : vector<16x8xi1>, vector<16x8xf32>
    %c0_14 = arith.constant 0 : index
    %c0_15 = arith.constant 0 : index
    %21 = vector.load %arg6[%c0_14, %c0_15] : memref<8x4xf32, #tpu.memory_space<vmem>>, vector<8x4xf32>
    %c0_16 = arith.constant 0 : index
    %c0_17 = arith.constant 0 : index
    %22 = vector.load %arg7[%c0_16, %c0_17] : memref<1x4xf32, #tpu.memory_space<vmem>>, vector<1x4xf32>
    %cst_18 = arith.constant dense<0.000000e+00> : vector<16x4xf32>
    %23 = tpu.matmul %20, %21, %cst_18 {dimension_numbers = #tpu.dot_dimension_numbers<[1], [0], [0], [1], [0, 0, 1, 1], [], []>} : vector<16x8xf32>, vector<8x4xf32>, vector<16x4xf32> -> vector<16x4xf32>
    %24 = vector.broadcast %22 : vector<1x4xf32> to vector<16x4xf32>
    %25 = arith.addf %23, %24 : vector<16x4xf32>
    %c0_19 = arith.constant 0 : index
    %c0_20 = arith.constant 0 : index
    %26 = vector.load %arg8[%c0_19, %c0_20] : memref<16x4xf32, #tpu.memory_space<vmem>>, vector<16x4xf32>
    tpu.vector_store %arg8[%c0_19, %c0_20], %25 {strides = array<i32>} : memref<16x4xf32, #tpu.memory_space<vmem>>, vector<16x4xf32>,
    return
  }
  func.func @transform_0(%arg0: i32) -> (i32, i32) {
    %c0_i32 = arith.constant 0 : i32
    %c0_i32_0 = arith.constant 0 : i32
    return %arg0, %c0_i32 : i32, i32
  }
  func.func @transform_1(%arg0: i32) -> (i32, i32) {
    %c0_i32 = arith.constant 0 : i32
    %c0_i32_0 = arith.constant 0 : i32
    %c0_i32_1 = arith.constant 0 : i32
    return %c0_i32, %c0_i32_0 : i32, i32
  }
  func.func @transform_2(%arg0: i32) -> (i32, i32) {
    %c0_i32 = arith.constant 0 : i32
    %c0_i32_0 = arith.constant 0 : i32
    %c0_i32_1 = arith.constant 0 : i32
    return %c0_i32, %c0_i32_0 : i32, i32
  }
  func.func @transform_3(%arg0: i32) -> (i32, i32) {
    %c0_i32 = arith.constant 0 : i32
    %c0_i32_0 = arith.constant 0 : i32
    %c0_i32_1 = arith.constant 0 : i32
    return %c0_i32, %c0_i32_0 : i32, i32
  }
  func.func @transform_4(%arg0: i32) -> (i32, i32) {
    %c0_i32 = arith.constant 0 : i32
    %c0_i32_0 = arith.constant 0 : i32
    %c0_i32_1 = arith.constant 0 : i32
    return %c0_i32, %c0_i32_0 : i32, i32
  }
  func.func @transform_5(%arg0: i32) -> (i32, i32) {
    %c0_i32 = arith.constant 0 : i32
    %c0_i32_0 = arith.constant 0 : i32
    %c0_i32_1 = arith.constant 0 : i32
    return %c0_i32, %c0_i32_0 : i32, i32
  }
  func.func @transform_6(%arg0: i32) -> (i32, i32) {
    %c0_i32 = arith.constant 0 : i32
    %c0_i32_0 = arith.constant 0 : i32
    %c0_i32_1 = arith.constant 0 : i32
    return %c0_i32, %c0_i32_0 : i32, i32
  }
  func.func @transform_7(%arg0: i32) -> (i32, i32) {
    %c0_i32 = arith.constant 0 : i32
    %c0_i32_0 = arith.constant 0 : i32
    return %arg0, %c0_i32 : i32, i32
  }
}

</mosaic_0001>

<llo_original>
// kernel: tpu_custom_call.1
$region0: #{tpu_custom_call.1}
  #allocation0 [shape = 'u32[]', space=smem, size = 0x4, offset = 0x4, fixed_abs, tag = 'smem constant byte address 0x4 - core index']
  #allocation1 [shape = 'u32[144,128]{1,0:T(1,128)}', space=vmem, size = 0x12000, scoped, tag = 'internal scratch']
  %s0 = inlined_call_operand.vmem [shape: f32[16,32], index: 0, kind: input, shape index: {}]
  %s1 = inlined_call_operand.vmem [shape: f32[32,16], index: 1, kind: input, shape index: {}]
  %s2 = inlined_call_operand.vmem [shape: f32[1,16], index: 2, kind: input, shape index: {}]
  %s3 = inlined_call_operand.vmem [shape: f32[16,8], index: 3, kind: input, shape index: {}]
  %s4 = inlined_call_operand.vmem [shape: f32[1,8], index: 4, kind: input, shape index: {}]
  %s5 = inlined_call_operand.vmem [shape: f32[8,4], index: 5, kind: input, shape index: {}]
  %s6 = inlined_call_operand.vmem [shape: f32[1,4], index: 6, kind: input, shape index: {}]
  %s7 = inlined_call_operand.vmem [shape: f32[16,4], index: 7, kind: output, shape index: {}]
  %s8 = sld [smem:[#allocation0]]
  $region38: #{tpu_custom_call.1} parent=0
    _
  %s10 = ssub.s32 1, %s8
  %s11 = scalar_select 0, %s10, %s8
  // Predicated region
  $region2: #{tpu_custom_call.1} parent=0 // pred_check
    _
  $region3: #{tpu_custom_call.1} parent=0 // pred_check_branch
    %13 = sbr.rel (0) target = $region5
  $region4: #{tpu_custom_call.1} parent=0 // pred_region
    _
  $region5: #{tpu_custom_call.1} parent=0 // pred_fallthru
    _
  // Predicated region
  $region6: #{tpu_custom_call.1} parent=0 // pred_check
    _
  $region7: #{tpu_custom_call.1} parent=0 // pred_check_branch
    %15 = sbr.rel (0) target = $region9
  $region8: #{tpu_custom_call.1} parent=0 // pred_region
    _
  $region9: #{tpu_custom_call.1} parent=0 // pred_fallthru
    _
  // Predicated region
  $region10: #{tpu_custom_call.1} parent=0 // pred_check
    _
  $region11: #{tpu_custom_call.1} parent=0 // pred_check_branch
    %17 = sbr.rel (0) target = $region13
  $region12: #{tpu_custom_call.1} parent=0 // pred_region
    _
  $region13: #{tpu_custom_call.1} parent=0 // pred_fallthru
    _
  // Predicated region
  $region14: #{tpu_custom_call.1} parent=0 // pred_check
    _
  $region15: #{tpu_custom_call.1} parent=0 // pred_check_branch
    %19 = sbr.rel (0) target = $region17
  $region16: #{tpu_custom_call.1} parent=0 // pred_region
    _
  $region17: #{tpu_custom_call.1} parent=0 // pred_fallthru
    _
  // Predicated region
  $region18: #{tpu_custom_call.1} parent=0 // pred_check
    _
  $region19: #{tpu_custom_call.1} parent=0 // pred_check_branch
    %21 = sbr.rel (0) target = $region21
  $region20: #{tpu_custom_call.1} parent=0 // pred_region
    _
  $region21: #{tpu_custom_call.1} parent=0 // pred_fallthru
    _
  // Predicated region
  $region22: #{tpu_custom_call.1} parent=0 // pred_check
    _
  $region23: #{tpu_custom_call.1} parent=0 // pred_check_branch
    %23 = sbr.rel (0) target = $region25
  $region24: #{tpu_custom_call.1} parent=0 // pred_region
    _
  $region25: #{tpu_custom_call.1} parent=0 // pred_fallthru
    _
  // Predicated region
  $region26: #{tpu_custom_call.1} parent=0 // pred_check
    _
  $region27: #{tpu_custom_call.1} parent=0 // pred_check_branch
    %25 = sbr.rel (0) target = $region29
  $region28: #{tpu_custom_call.1} parent=0 // pred_region
    _
  $region29: #{tpu_custom_call.1} parent=0 // pred_fallthru
    _
  %v26 = vld [vmem:[%s0] sm:$0xff]
  %v27 = vld [vmem:[%s0 + $0x8] sm:$0xff]
  %v28 = vld [vmem:[%s1] sm:$0xff]
  %v29 = vld [vmem:[%s1 + $0x8] sm:$0xff]
  %v30 = vld [vmem:[%s1 + $0x10] sm:$0xff]
  %v31 = vld [vmem:[%s1 + $0x18] sm:$0xff]
  %v32 = vld [vmem:[%s2] sm:$0x1]
  %v34 = vlaneseq
  %v35 = vshrl.u32 %v34, 7
  %v36 = vsub.s32 0, %v35
  %v37 = vrot.slane %v32, %v36
  %vm39 = vcmask 261120
  %v41 = vsel %vm39, %v26, 0
  %v44 = vsel %vm39, %v27, 0
  %46 = vmatprep.subr.mxu0 0.0
  %47 = vmatpush1.msra.mxu0 0.0
  %48 = vmatprep.subr.mxu0 0.0
  %49 = vmatpush1.msra.mxu0 0.0
  %50 = vmatprep.subr.mxu0 0.0
  %51 = vmatpush1.msra.mxu0 0.0
  %52 = vmatprep.subr.mxu0 0.0
  %53 = vmatpush1.msra.mxu0 0.0
  %54 = vmatprep.subr.mxu0 0.0
  %55 = vmatpush1.msra.mxu0 0.0
  %56 = vmatprep.subr.mxu0 0.0
  %57 = vmatpush1.msra.mxu0 0.0
  %58 = vmatprep.subr.mxu0 0.0
  %59 = vmatpush1.msra.mxu0 0.0
  %60 = vmatprep.subr.mxu0 0.0
  %61 = vmatpush1.msra.mxu0 0.0
  %62 = vmatprep.subr.mxu0 0.0
  %63 = vmatpush1.msra.mxu0 0.0
  %64 = vmatprep.subr.mxu0 0.0
  %65 = vmatpush1.msra.mxu0 0.0
  %66 = vmatprep.subr.mxu0 0.0
  %67 = vmatpush1.msra.mxu0 0.0
  %68 = vmatprep.subr.mxu0 0.0
  %69 = vmatpush1.msra.mxu0 0.0
  %70 = vmatprep.subr.mxu0 0.0
  %71 = vmatpush1.msra.mxu0 %v31
  %72 = vmatprep.subr.mxu0 0.0
  %73 = vmatpush1.msra.mxu0 %v30
  %74 = vmatprep.subr.mxu0 0.0
  %75 = vmatpush1.msra.mxu0 %v29
  %76 = vmatprep.subr.mxu0 0.0
  %77 = vmatpush1.msra.mxu0 %v28
  %78 = vmatprep.subr.mxu0 0.0
  %79 = vmatpush2.msra.mxu0 0.0
  %80 = vmatprep.subr.mxu0 0.0
  %81 = vmatpush2.msra.mxu0 0.0
  %82 = vmatprep.subr.mxu0 0.0
  %83 = vmatpush2.msra.mxu0 0.0
  %84 = vmatprep.subr.mxu0 0.0
  %85 = vmatpush2.msra.mxu0 0.0
  %86 = vmatprep.subr.mxu0 0.0
  %87 = vmatpush2.msra.mxu0 0.0
  %88 = vmatprep.subr.mxu0 0.0
  %89 = vmatpush2.msra.mxu0 0.0
  %90 = vmatprep.subr.mxu0 0.0
  %91 = vmatpush2.msra.mxu0 0.0
  %92 = vmatprep.subr.mxu0 0.0
  %93 = vmatpush2.msra.mxu0 0.0
  %94 = vmatprep.subr.mxu0 0.0
  %95 = vmatpush2.msra.mxu0 0.0
  %96 = vmatprep.subr.mxu0 0.0
  %97 = vmatpush2.msra.mxu0 0.0
  %98 = vmatprep.subr.mxu0 0.0
  %99 = vmatpush2.msra.mxu0 0.0
  %100 = vmatprep.subr.mxu0 0.0
  %101 = vmatpush2.msra.mxu0 0.0
  %102 = vmatprep.subr.mxu0 0.0
  %103 = vmatpush2.msra.mxu0 0.0
  %104 = vmatprep.subr.mxu0 0.0
  %105 = vmatpush2.msra.mxu0 0.0
  %106 = vmatprep.subr.mxu0 0.0
  %107 = vmatpush2.msra.mxu0 0.0
  %108 = vmatprep.subr.mxu0 0.0
  %109 = vmatpush2.msra.mxu0 0.0
  %110 = vmatprep.mubr.f32.mxu0 0.0
  %111 = vmatmul.mubr.f32.gmra.mxu0 %v41
  %v112 = vpop.f32.mrf.mxu0
  %v113 = vadd.f32 %v37, %v112
  %v114 = vpop.f32.mrf.mxu0
  %115 = vmatprep.mubr.f32.mxu0 0.0
  %116 = vmatmul.mubr.f32.gmra.mxu0 %v44
  %v117 = vpop.f32.mrf.mxu0
  %v118 = vadd.f32 %v37, %v117
  %v119 = vpop.f32.mrf.mxu0
  %120 = vdwg.mxu0
  %vm121 = vcmp.ge.f32.partialorder %v113, 0.0
  %vm122 = vcmp.ge.f32.partialorder %v118, 0.0
  %v123 = vmul.f32 %v113, 0.01
  %v124 = vmul.f32 %v118, 0.01
  %v125 = vsel %vm121, %v113, %v123
  %v126 = vsel %vm122, %v118, %v124
  %v127 = vld [vmem:[%s3] sm:$0xff]
  %v128 = vld [vmem:[%s3 + $0x8] sm:$0xff]
  %v129 = vld [vmem:[%s4] sm:$0x1]
  %v131 = vlaneseq
  %v132 = vshrl.u32 %v131, 7
  %v133 = vsub.s32 0, %v132
  %v134 = vrot.slane %v129, %v133
  %vm136 = vcmask 130048
  %v138 = vsel %vm136, %v125, 0
  %v141 = vsel %vm136, %v126, 0
  %143 = vmatprep.subr.mxu0 0.0
  %144 = vmatpush1.msra.mxu0 0.0
  %145 = vmatprep.subr.mxu0 0.0
  %146 = vmatpush1.msra.mxu0 0.0
  %147 = vmatprep.subr.mxu0 0.0
  %148 = vmatpush1.msra.mxu0 0.0
  %149 = vmatprep.subr.mxu0 0.0
  %150 = vmatpush1.msra.mxu0 0.0
  %151 = vmatprep.subr.mxu0 0.0
  %152 = vmatpush1.msra.mxu0 0.0
  %153 = vmatprep.subr.mxu0 0.0
  %154 = vmatpush1.msra.mxu0 0.0
  %155 = vmatprep.subr.mxu0 0.0
  %156 = vmatpush1.msra.mxu0 0.0
  %157 = vmatprep.subr.mxu0 0.0
  %158 = vmatpush1.msra.mxu0 0.0
  %159 = vmatprep.subr.mxu0 0.0
  %160 = vmatpush1.msra.mxu0 0.0
  %161 = vmatprep.subr.mxu0 0.0
  %162 = vmatpush1.msra.mxu0 0.0
  %163 = vmatprep.subr.mxu0 0.0
  %164 = vmatpush1.msra.mxu0 0.0
  %165 = vmatprep.subr.mxu0 0.0
  %166 = vmatpush1.msra.mxu0 0.0
  %167 = vmatprep.subr.mxu0 0.0
  %168 = vmatpush1.msra.mxu0 0.0
  %169 = vmatprep.subr.mxu0 0.0
  %170 = vmatpush1.msra.mxu0 0.0
  %171 = vmatprep.subr.mxu0 0.0
  %172 = vmatpush1.msra.mxu0 %v128
  %173 = vmatprep.subr.mxu0 0.0
  %174 = vmatpush1.msra.mxu0 %v127
  %175 = vmatprep.subr.mxu0 0.0
  %176 = vmatpush2.msra.mxu0 0.0
  %177 = vmatprep.subr.mxu0 0.0
  %178 = vmatpush2.msra.mxu0 0.0
  %179 = vmatprep.subr.mxu0 0.0
  %180 = vmatpush2.msra.mxu0 0.0
  %181 = vmatprep.subr.mxu0 0.0
  %182 = vmatpush2.msra.mxu0 0.0
  %183 = vmatprep.subr.mxu0 0.0
  %184 = vmatpush2.msra.mxu0 0.0
  %185 = vmatprep.subr.mxu0 0.0
  %186 = vmatpush2.msra.mxu0 0.0
  %187 = vmatprep.subr.mxu0 0.0
  %188 = vmatpush2.msra.mxu0 0.0
  %189 = vmatprep.subr.mxu0 0.0
  %190 = vmatpush2.msra.mxu0 0.0
  %191 = vmatprep.subr.mxu0 0.0
  %192 = vmatpush2.msra.mxu0 0.0
  %193 = vmatprep.subr.mxu0 0.0
  %194 = vmatpush2.msra.mxu0 0.0
  %195 = vmatprep.subr.mxu0 0.0
  %196 = vmatpush2.msra.mxu0 0.0
  %197 = vmatprep.subr.mxu0 0.0
  %198 = vmatpush2.msra.mxu0 0.0
  %199 = vmatprep.subr.mxu0 0.0
  %200 = vmatpush2.msra.mxu0 0.0
  %201 = vmatprep.subr.mxu0 0.0
  %202 = vmatpush2.msra.mxu0 0.0
  %203 = vmatprep.subr.mxu0 0.0
  %204 = vmatpush2.msra.mxu0 0.0
  %205 = vmatprep.subr.mxu0 0.0
  %206 = vmatpush2.msra.mxu0 0.0
  %207 = vmatprep.mubr.f32.mxu0 0.0
  %208 = vmatmul.mubr.f32.gmra.mxu0 %v138
  %v209 = vpop.f32.mrf.mxu0
  %v210 = vadd.f32 %v134, %v209
  %v211 = vpop.f32.mrf.mxu0
  %212 = vmatprep.mubr.f32.mxu0 0.0
  %213 = vmatmul.mubr.f32.gmra.mxu0 %v141
  %v214 = vpop.f32.mrf.mxu0
  %v215 = vadd.f32 %v134, %v214
  %v216 = vpop.f32.mrf.mxu0
  %217 = vdwg.mxu0
  %vm218 = vcmp.ge.f32.partialorder %v210, 0.0
  %vm219 = vcmp.ge.f32.partialorder %v215, 0.0
  %v220 = vmul.f32 %v210, 0.01
  %v221 = vmul.f32 %v215, 0.01
  %v222 = vsel %vm218, %v210, %v220
  %v223 = vsel %vm219, %v215, %v221
  %v224 = vld [vmem:[%s5] sm:$0xff]
  %v225 = vld [vmem:[%s6] sm:$0x1]
  %v227 = vlaneseq
  %v228 = vshrl.u32 %v227, 7
  %v229 = vsub.s32 0, %v228
  %v230 = vrot.slane %v225, %v229
  %vm232 = vcmask 64512
  %v234 = vsel %vm232, %v222, 0
  %v237 = vsel %vm232, %v223, 0
  %239 = vmatprep.subr.mxu0 0.0
  %240 = vmatpush1.msra.mxu0 0.0
  %241 = vmatprep.subr.mxu0 0.0
  %242 = vmatpush1.msra.mxu0 0.0
  %243 = vmatprep.subr.mxu0 0.0
  %244 = vmatpush1.msra.mxu0 0.0
  %245 = vmatprep.subr.mxu0 0.0
  %246 = vmatpush1.msra.mxu0 0.0
  %247 = vmatprep.subr.mxu0 0.0
  %248 = vmatpush1.msra.mxu0 0.0
  %249 = vmatprep.subr.mxu0 0.0
  %250 = vmatpush1.msra.mxu0 0.0
  %251 = vmatprep.subr.mxu0 0.0
  %252 = vmatpush1.msra.mxu0 0.0
  %253 = vmatprep.subr.mxu0 0.0
  %254 = vmatpush1.msra.mxu0 0.0
  %255 = vmatprep.subr.mxu0 0.0
  %256 = vmatpush1.msra.mxu0 0.0
  %257 = vmatprep.subr.mxu0 0.0
  %258 = vmatpush1.msra.mxu0 0.0
  %259 = vmatprep.subr.mxu0 0.0
  %260 = vmatpush1.msra.mxu0 0.0
  %261 = vmatprep.subr.mxu0 0.0
  %262 = vmatpush1.msra.mxu0 0.0
  %263 = vmatprep.subr.mxu0 0.0
  %264 = vmatpush1.msra.mxu0 0.0
  %265 = vmatprep.subr.mxu0 0.0
  %266 = vmatpush1.msra.mxu0 0.0
  %267 = vmatprep.subr.mxu0 0.0
  %268 = vmatpush1.msra.mxu0 0.0
  %269 = vmatprep.subr.mxu0 0.0
  %270 = vmatpush1.msra.mxu0 %v224
  %271 = vmatprep.subr.mxu0 0.0
  %272 = vmatpush2.msra.mxu0 0.0
  %273 = vmatprep.subr.mxu0 0.0
  %274 = vmatpush2.msra.mxu0 0.0
  %275 = vmatprep.subr.mxu0 0.0
  %276 = vmatpush2.msra.mxu0 0.0
  %277 = vmatprep.subr.mxu0 0.0
  %278 = vmatpush2.msra.mxu0 0.0
  %279 = vmatprep.subr.mxu0 0.0
  %280 = vmatpush2.msra.mxu0 0.0
  %281 = vmatprep.subr.mxu0 0.0
  %282 = vmatpush2.msra.mxu0 0.0
  %283 = vmatprep.subr.mxu0 0.0
  %284 = vmatpush2.msra.mxu0 0.0
  %285 = vmatprep.subr.mxu0 0.0
  %286 = vmatpush2.msra.mxu0 0.0
  %287 = vmatprep.subr.mxu0 0.0
  %288 = vmatpush2.msra.mxu0 0.0
  %289 = vmatprep.subr.mxu0 0.0
  %290 = vmatpush2.msra.mxu0 0.0
  %291 = vmatprep.subr.mxu0 0.0
  %292 = vmatpush2.msra.mxu0 0.0
  %293 = vmatprep.subr.mxu0 0.0
  %294 = vmatpush2.msra.mxu0 0.0
  %295 = vmatprep.subr.mxu0 0.0
  %296 = vmatpush2.msra.mxu0 0.0
  %297 = vmatprep.subr.mxu0 0.0
  %298 = vmatpush2.msra.mxu0 0.0
  %299 = vmatprep.subr.mxu0 0.0
  %300 = vmatpush2.msra.mxu0 0.0
  %301 = vmatprep.subr.mxu0 0.0
  %302 = vmatpush2.msra.mxu0 0.0
  %303 = vmatprep.mubr.f32.mxu0 0.0
  %304 = vmatmul.mubr.f32.gmra.mxu0 %v234
  %v305 = vpop.f32.mrf.mxu0
  %v306 = vadd.f32 %v230, %v305
  %v307 = vpop.f32.mrf.mxu0
  %308 = vmatprep.mubr.f32.mxu0 0.0
  %309 = vmatmul.mubr.f32.gmra.mxu0 %v237
  %v310 = vpop.f32.mrf.mxu0
  %v311 = vadd.f32 %v230, %v310
  %v312 = vpop.f32.mrf.mxu0
  %313 = vdwg.mxu0
  %vm314 = vcmask 31744
  %315 = vst.msk [vmem:[%s7] sm:$0xff] %vm314, %v306
  %316 = vst.msk [vmem:[%s7 + $0x8] sm:$0xff] %vm314, %v311
  // Predicated region
  $region30: #{tpu_custom_call.1} parent=0 // pred_check
    _
  $region31: #{tpu_custom_call.1} parent=0 // pred_check_branch
    %318 = sbr.rel (0) target = $region33
  $region32: #{tpu_custom_call.1} parent=0 // pred_region
    _
  $region33: #{tpu_custom_call.1} parent=0 // pred_fallthru
    _
  // Predicated region
  $region34: #{tpu_custom_call.1} parent=0 // pred_check
    _
  $region35: #{tpu_custom_call.1} parent=0 // pred_check_branch
    %320 = sbr.rel (0) target = $region37
  $region36: #{tpu_custom_call.1} parent=0 // pred_region
    _
  $region37: #{tpu_custom_call.1} parent=0 // pred_fallthru
    _

</llo_original>
